<compile_context>
chip_gen: v6e
topology: v6e:2x2x1
jax: 0.10.0
libtpu: 0.0.40
codegen_flags: <defaults>
</compile_context>

<pallas_src>
import functools

import jax
import jax.numpy as jnp
from jax.experimental import pallas as pl
from jax.experimental.pallas import tpu as pltpu


HIDDEN = 128     # fixed by the PyTorch module: nn.Linear(input_size, 128)
LANES = 128      # packed-parameter slab width (hidden fills all 128 lanes)


def _round_up(x, m):
    return (x + m - 1) // m * m


def _l1_rows(d_in):
    # Rows used by the [W1 ; b1] section, padded to a sublane multiple (8) so
    # the W2 block that follows starts on an (8,128) tile boundary.
    return _round_up(d_in + 1, 8)


def _a_out(n_actions):
    # Narrow, lane-padded kernel output width (masked vst, same vreg count).
    return _round_up(max(n_actions, 1), 8)


def pgn_kernel(x_ref, p_ref, o_ref, *, d_in, hidden, l1_rows, mxu_layer1):
    """Fused MLP on one batch tile.

    x_ref : (Bt, d_in) f32
    p_ref : (rows, LANES) f32 packed params:
              rows [0, d_in)                    -> W1 (d_in, hidden)
              row  d_in                         -> b1 (1, hidden)
              rows [d_in+1, l1_rows)            -> zero padding (8-row align)
              rows [l1_rows, l1_rows+hidden)    -> W2 (hidden, LANES), zero-padded
              row  l1_rows+hidden               -> b2 (1, LANES), zero-padded
    o_ref : (Bt, a_out) f32, a_out = lane-padded n_actions (real logits in
            [:, :n_actions], sliced by the wrapper)
    """
    x = x_ref[...]                                    # (Bt, d_in)
    b1 = p_ref[d_in:d_in + 1, :]                      # (1, hidden)

    if mxu_layer1:
        # Throughput (tiled) path: tiny-K matmul rides the MXU and overlaps
        # the batch-tile DMAs under the grid pipeline.
        h = jnp.dot(x, p_ref[0:d_in, :],
                    preferred_element_type=jnp.float32) + b1
    else:
        # Latency-bound small-batch path: unrolled VPU broadcast-FMA over the
        # tiny K = d_in axis, avoids MXU push/pop latency.
        h = b1
        for k in range(d_in):                         # static unroll, d_in tiny
            h = h + x[:, k:k + 1] * p_ref[k:k + 1, :]
    h = jnp.maximum(h, 0.0)                           # ReLU, (Bt, hidden)

    # Layer 2: (Bt,H) @ (H,LANES) MXU matmul + bias.  W2 slice starts on an
    # 8-aligned row -> free view, no sublane realignment before the RHS push.
    w2 = p_ref[l1_rows:l1_rows + hidden, :]           # (hidden, LANES)
    b2 = p_ref[l1_rows + hidden:l1_rows + hidden + 1, :]
    y = jnp.dot(h, w2, preferred_element_type=jnp.float32) + b2

    a_out = o_ref.shape[-1]
    o_ref[...] = y[:, :a_out].astype(o_ref.dtype)     # narrow (masked) store


def pack_params(w1, b1, w2, b2):
    """Pack (w1, b1, w2, b2) into one sublane-aligned (rows, 128) f32 slab."""
    d_in, hidden = w1.shape
    n_actions = w2.shape[1]
    assert hidden == HIDDEN and n_actions <= LANES
    l1 = _l1_rows(d_in)
    rows = _round_up(l1 + hidden + 1, 8)
    p = jnp.zeros((rows, LANES), jnp.float32)
    p = p.at[:d_in, :hidden].set(w1.astype(jnp.float32))
    p = p.at[d_in, :hidden].set(b1.astype(jnp.float32).reshape(hidden))
    p = p.at[l1:l1 + hidden, :n_actions].set(w2.astype(jnp.float32))
    p = p.at[l1 + hidden, :n_actions].set(b2.astype(jnp.float32).reshape(n_actions))
    return p


def pgn_forward(x, params, *, input_size, n_actions, hidden=HIDDEN,
                block_b=4096, small_batch_max=256):
    """y = relu(x @ W1 + b1) @ W2 + b2   (same math as the PyTorch module)."""
    B = x.shape[0]
    assert x.shape[1] == input_size
    assert hidden == LANES and n_actions <= LANES
    l1 = _l1_rows(input_size)
    a_out = _a_out(n_actions)
    assert params.shape == (_round_up(l1 + hidden + 1, 8), LANES)

    if B <= small_batch_max:
        # Small batch (action selection): gridless call, whole-array VMEM
        # blocks, params arrive in a single DMA, layer 1 on the VPU.
        kernel = functools.partial(pgn_kernel, d_in=input_size, hidden=hidden,
                                   l1_rows=l1, mxu_layer1=False)
        out = pl.pallas_call(
            kernel,
            out_shape=jax.ShapeDtypeStruct((B, a_out), jnp.float32),
            in_specs=[
                pl.BlockSpec(memory_space=pltpu.MemorySpace.VMEM),
                pl.BlockSpec(memory_space=pltpu.MemorySpace.VMEM),
            ],
            out_specs=pl.BlockSpec(memory_space=pltpu.MemorySpace.VMEM),
        )(x, params)
    else:
        # Large batch (RL rollout): tile over B with big tiles (amortize the
        # ~0.35us/step grid overhead), but keep >= 2 grid steps so both v7x
        # TensorCores get work; params stay resident in VMEM across tiles.
        kernel = functools.partial(pgn_kernel, d_in=input_size, hidden=hidden,
                                   l1_rows=l1, mxu_layer1=True)
        bt = max(256, min(block_b, _round_up(pl.cdiv(B, 2), 256)))
        grid = (pl.cdiv(B, bt),)  # ragged last block: reads padded, writes masked
        out = pl.pallas_call(
            kernel,
            out_shape=jax.ShapeDtypeStruct((B, a_out), jnp.float32),
            grid=grid,
            in_specs=[
                pl.BlockSpec((bt, input_size), lambda i: (i, 0)),
                # Constant index_map -> single fetch, resident across tiles.
                pl.BlockSpec(params.shape, lambda i: (0, 0)),
            ],
            out_specs=pl.BlockSpec((bt, a_out), lambda i: (i, 0)),
            compiler_params=pltpu.CompilerParams(
                dimension_semantics=("parallel",),
            ),
        )(x, params)

    return out[:, :n_actions]


def init_params(key, input_size, hidden, n_actions):
    # Deterministic synthetic init (PyTorch-Linear-style uniform bounds),
    # weights stored as (in_features, out_features).
    k1, k2, k3, k4 = jax.random.split(key, 4)
    bound1 = 1.0 / (input_size ** 0.5)
    bound2 = 1.0 / (hidden ** 0.5)
    w1 = jax.random.uniform(k1, (input_size, hidden), jnp.float32, -bound1, bound1)
    b1 = jax.random.uniform(k2, (1, hidden), jnp.float32, -bound1, bound1)
    w2 = jax.random.uniform(k3, (hidden, n_actions), jnp.float32, -bound2, bound2)
    b2 = jax.random.uniform(k4, (1, n_actions), jnp.float32, -bound2, bound2)
    return w1, b1, w2, b2


if __name__ == "__main__":
    input_size = 4    # CartPole observation dim
    n_actions = 2     # CartPole action dim
    hidden = HIDDEN
    batch = 8

    key = jax.random.PRNGKey(0)
    kx, kp, kbig = jax.random.split(key, 3)
    x = jax.random.normal(kx, (batch, input_size), jnp.float32)
    w1, b1, w2, b2 = init_params(kp, input_size, hidden, n_actions)
    params = pack_params(w1, b1, w2, b2)

    def ref_fn(xin):
        return jnp.maximum(xin @ w1 + b1, 0.0) @ w2 + b2

    # Small-batch (gridless, VPU layer-1) path.
    out = pgn_forward(x, params, input_size=input_size, n_actions=n_actions)
    out = jax.block_until_ready(out)
    assert out.shape == (batch, n_actions)
    assert jnp.allclose(out, ref_fn(x), atol=1e-4, rtol=1e-4)

    # Large-batch (B-tiled, weights-resident, MXU layer-1, "parallel") path,
    # with a batch that is not a multiple of the tile to exercise the masked
    # ragged edge block and a >=2-step grid.
    big_b = 600
    xb = jax.random.normal(kbig, (big_b, input_size), jnp.float32)
    out_b = pgn_forward(xb, params, input_size=input_size, n_actions=n_actions)
    out_b = jax.block_until_ready(out_b)
    assert out_b.shape == (big_b, n_actions)
    assert jnp.allclose(out_b, ref_fn(xb), atol=1e-4, rtol=1e-4)

    print("KERNEL_OK")
</pallas_src>

<mosaic_0001>
module attributes {stable_mosaic.version = 11 : i64} {
  func.func @pgn_kernel(%arg0: memref<8x4xf32, #tpu.memory_space<vmem>>, %arg1: memref<144x128xf32, #tpu.memory_space<vmem>>, %arg2: memref<8x8xf32, #tpu.memory_space<vmem>>) attributes {dimension_semantics = [], scalar_prefetch = 0 : i64, scratch_operands = 0 : i64, tpu.core_type = #tpu.core_type<tc>} {
    %c0 = arith.constant 0 : index
    %c0_0 = arith.constant 0 : index
    %0 = vector.load %arg0[%c0, %c0_0] : memref<8x4xf32, #tpu.memory_space<vmem>>, vector<8x4xf32>
    %c4 = arith.constant 4 : index
    %c0_1 = arith.constant 0 : index
    %1 = vector.load %arg1[%c4, %c0_1] : memref<144x128xf32, #tpu.memory_space<vmem>>, vector<1x128xf32>
    %2 = vector.extract_strided_slice %0 {offsets = [0, 0], sizes = [8, 1], strides = [1, 1]} : vector<8x4xf32> to vector<8x1xf32>
    %c0_2 = arith.constant 0 : index
    %c0_3 = arith.constant 0 : index
    %3 = vector.load %arg1[%c0_2, %c0_3] : memref<144x128xf32, #tpu.memory_space<vmem>>, vector<1x128xf32>
    %4 = vector.broadcast %2 : vector<8x1xf32> to vector<8x128xf32>
    %5 = vector.broadcast %3 : vector<1x128xf32> to vector<8x128xf32>
    %6 = arith.mulf %4, %5 : vector<8x128xf32>
    %7 = vector.broadcast %1 : vector<1x128xf32> to vector<8x128xf32>
    %8 = arith.addf %7, %6 : vector<8x128xf32>
    %9 = vector.extract_strided_slice %0 {offsets = [0, 1], sizes = [8, 1], strides = [1, 1]} : vector<8x4xf32> to vector<8x1xf32>
    %c1 = arith.constant 1 : index
    %c0_4 = arith.constant 0 : index
    %10 = vector.load %arg1[%c1, %c0_4] : memref<144x128xf32, #tpu.memory_space<vmem>>, vector<1x128xf32>
    %11 = vector.broadcast %9 : vector<8x1xf32> to vector<8x128xf32>
    %12 = vector.broadcast %10 : vector<1x128xf32> to vector<8x128xf32>
    %13 = arith.mulf %11, %12 : vector<8x128xf32>
    %14 = arith.addf %8, %13 : vector<8x128xf32>
    %15 = vector.extract_strided_slice %0 {offsets = [0, 2], sizes = [8, 1], strides = [1, 1]} : vector<8x4xf32> to vector<8x1xf32>
    %c2 = arith.constant 2 : index
    %c0_5 = arith.constant 0 : index
    %16 = vector.load %arg1[%c2, %c0_5] : memref<144x128xf32, #tpu.memory_space<vmem>>, vector<1x128xf32>
    %17 = vector.broadcast %15 : vector<8x1xf32> to vector<8x128xf32>
    %18 = vector.broadcast %16 : vector<1x128xf32> to vector<8x128xf32>
    %19 = arith.mulf %17, %18 : vector<8x128xf32>
    %20 = arith.addf %14, %19 : vector<8x128xf32>
    %21 = vector.extract_strided_slice %0 {offsets = [0, 3], sizes = [8, 1], strides = [1, 1]} : vector<8x4xf32> to vector<8x1xf32>
    %c3 = arith.constant 3 : index
    %c0_6 = arith.constant 0 : index
    %22 = vector.load %arg1[%c3, %c0_6] : memref<144x128xf32, #tpu.memory_space<vmem>>, vector<1x128xf32>
    %23 = vector.broadcast %21 : vector<8x1xf32> to vector<8x128xf32>
    %24 = vector.broadcast %22 : vector<1x128xf32> to vector<8x128xf32>
    %25 = arith.mulf %23, %24 : vector<8x128xf32>
    %26 = arith.addf %20, %25 : vector<8x128xf32>
    %cst = arith.constant 0.000000e+00 : f32
    %27 = vector.broadcast %cst : f32 to vector<8x128xf32>
    %28 = arith.maximumf %26, %27 : vector<8x128xf32>
    %c8 = arith.constant 8 : index
    %c0_7 = arith.constant 0 : index
    %29 = vector.load %arg1[%c8, %c0_7] : memref<144x128xf32, #tpu.memory_space<vmem>>, vector<128x128xf32>
    %c136 = arith.constant 136 : index
    %c0_8 = arith.constant 0 : index
    %30 = vector.load %arg1[%c136, %c0_8] : memref<144x128xf32, #tpu.memory_space<vmem>>, vector<1x128xf32>
    %cst_9 = arith.constant dense<0.000000e+00> : vector<8x128xf32>
    %31 = tpu.matmul %28, %29, %cst_9 {dimension_numbers = #tpu.dot_dimension_numbers<[1], [0], [0], [1], [0, 0, 1, 1], [], []>} : vector<8x128xf32>, vector<128x128xf32>, vector<8x128xf32> -> vector<8x128xf32>
    %32 = vector.broadcast %30 : vector<1x128xf32> to vector<8x128xf32>
    %33 = arith.addf %31, %32 : vector<8x128xf32>
    %34 = vector.extract_strided_slice %33 {offsets = [0, 0], sizes = [8, 8], strides = [1, 1]} : vector<8x128xf32> to vector<8x8xf32>
    %c0_10 = arith.constant 0 : index
    %c0_11 = arith.constant 0 : index
    %35 = vector.load %arg2[%c0_10, %c0_11] : memref<8x8xf32, #tpu.memory_space<vmem>>, vector<8x8xf32>
    tpu.vector_store %arg2[%c0_10, %c0_11], %34 {strides = array<i32>} : memref<8x8xf32, #tpu.memory_space<vmem>>, vector<8x8xf32>,
    return
  }
}

</mosaic_0001>

<llo_original>
// kernel: tpu_custom_call.1
$region0: #{tpu_custom_call.1}
  #allocation0 [shape = 'u32[]', space=smem, size = 0x4, offset = 0x4, fixed_abs, tag = 'smem constant byte address 0x4 - core index']
  #allocation1 [shape = 'u32[144,128]{1,0:T(1,128)}', space=vmem, size = 0x12000, scoped, tag = 'internal scratch']
  %s0 = inlined_call_operand.vmem [shape: f32[8,4], index: 0, kind: input, shape index: {}]
  %s1 = inlined_call_operand.hbm [shape: f32[144,128], index: 1, kind: input, shape index: {}]
  %s2 = inlined_call_operand.hbm [shape: f32[8,8], index: 2, kind: output, shape index: {}]
  %s3 = sld [smem:[#allocation0]]
  $region22: #{tpu_custom_call.1} parent=0
    _
  %s5 = ssub.s32 1, %s3
  %s6 = scalar_select 0, %s5, %s3
  $region1: #{tpu_custom_call.1} parent=0
    #allocation2 [shape = 'u8[73728]{0}', space=vmem, size = 0x12000, scoped, tag = 'input window, operand 1, single buffered']
    #allocation3 [shape = 's32[1]{0}', space=sflag, size = 0x4, scoped, tag = 'scoped memory for tpu_custom_call.1']
    #allocation4 [shape = 's32[1]{0}', space=sflag, size = 0x4, scoped, tag = 'scoped memory for tpu_custom_call.1']
    #allocation5 [shape = 'u8[4096]{0}', space=vmem, size = 0x1000, scoped, tag = 'output window, operand 0, single buffered']
    %7 = vsyncpa [#allocation3], 0
    %8 = vsyncpa [#allocation4], 0
    // Predicated region
    $region2: #{tpu_custom_call.1} parent=1 // pred_check
      _
    $region3: #{tpu_custom_call.1} parent=1 // pred_check_branch
      %10 = sbr.rel (0) target = $region5
    $region4: #{tpu_custom_call.1} parent=1 // pred_region
      _
    $region5: #{tpu_custom_call.1} parent=1 // pred_fallthru
      _
    // Predicated region
    $region6: #{tpu_custom_call.1} parent=1 // pred_check
      _
    $region7: #{tpu_custom_call.1} parent=1 // pred_check_branch
      %12 = sbr.rel (0) target = $region9
    $region8: #{tpu_custom_call.1} parent=1 // pred_region
      %s14 = ssub.s32 2304, 2304
      %15 = vsyncadd [#allocation3], %s14
      %s16 = sshll.u32 [#allocation2], 4
      %s17 = int_to_ptr.vmem [resolvable:$true] %s16
      %22 = dma.hbm_to_vmem [thread:$0]  %s1, 2304, %s17, [#allocation3], 128, 128, 8
    $region9: #{tpu_custom_call.1} parent=1 // pred_fallthru
      _
    // Predicated region
    $region10: #{tpu_custom_call.1} parent=1 // pred_check
      _
    $region11: #{tpu_custom_call.1} parent=1 // pred_check_branch
      %24 = sbr.rel (0) target = $region13
    $region12: #{tpu_custom_call.1} parent=1 // pred_region
      %25 = dma.done [#allocation3], 2304
    $region13: #{tpu_custom_call.1} parent=1 // pred_fallthru
      _
    %v26 = vld [vmem:[%s0] sm:$0xff]
    %v27 = vld [vmem:[#allocation2 + $0x4] sm:$0x1]
    %v28 = vld [vmem:[#allocation2] sm:$0x1]
    %30 = vset.pattern.permute.xlu0 0
    %31 = vperm.xlu0 %30, %v26
    %v32 = vpop.permute.xlu0 %31
    %v34 = vlaneseq
    %v35 = vshrl.u32 %v34, 7
    %v36 = vsub.s32 0, %v35
    %v37 = vrot.slane %v28, %v36
    %v38 = vmul.f32 %v32, %v37
    %v39 = vlaneseq
    %v40 = vshrl.u32 %v39, 7
    %v41 = vsub.s32 0, %v40
    %v42 = vrot.slane %v27, %v41
    %v43 = vadd.f32 %v42, %v38
    %v44 = vld [vmem:[#allocation2 + $0x1] sm:$0x1]
    %45 = vset.pattern.permute.xlu0 1
    %46 = vperm.xlu0 %45, %v26
    %v47 = vpop.permute.xlu0 %46
    %v49 = vlaneseq
    %v50 = vshrl.u32 %v49, 7
    %v51 = vsub.s32 0, %v50
    %v52 = vrot.slane %v44, %v51
    %v53 = vmul.f32 %v47, %v52
    %v54 = vadd.f32 %v43, %v53
    %v55 = vld [vmem:[#allocation2 + $0x2] sm:$0x1]
    %56 = vset.pattern.permute.xlu0 2
    %57 = vperm.xlu0 %56, %v26
    %v58 = vpop.permute.xlu0 %57
    %v60 = vlaneseq
    %v61 = vshrl.u32 %v60, 7
    %v62 = vsub.s32 0, %v61
    %v63 = vrot.slane %v55, %v62
    %v64 = vmul.f32 %v58, %v63
    %v65 = vadd.f32 %v54, %v64
    %v66 = vld [vmem:[#allocation2 + $0x3] sm:$0x1]
    %67 = vset.pattern.permute.xlu0 3
    %68 = vperm.xlu0 %67, %v26
    %v69 = vpop.permute.xlu0 %68
    %v71 = vlaneseq
    %v72 = vshrl.u32 %v71, 7
    %v73 = vsub.s32 0, %v72
    %v74 = vrot.slane %v66, %v73
    %v75 = vmul.f32 %v69, %v74
    %v76 = vadd.f32 %v65, %v75
    %v77 = vmax.f32 %v76, 0.0
    %v78 = vld [vmem:[#allocation2 + $0x8] sm:$0xff]
    %v79 = vld [vmem:[#allocation2 + $0x10] sm:$0xff]
    %v80 = vld [vmem:[#allocation2 + $0x18] sm:$0xff]
    %v81 = vld [vmem:[#allocation2 + $0x20] sm:$0xff]
    %v82 = vld [vmem:[#allocation2 + $0x28] sm:$0xff]
    %v83 = vld [vmem:[#allocation2 + $0x30] sm:$0xff]
    %v84 = vld [vmem:[#allocation2 + $0x38] sm:$0xff]
    %v85 = vld [vmem:[#allocation2 + $0x40] sm:$0xff]
    %v86 = vld [vmem:[#allocation2 + $0x48] sm:$0xff]
    %v87 = vld [vmem:[#allocation2 + $0x50] sm:$0xff]
    %v88 = vld [vmem:[#allocation2 + $0x58] sm:$0xff]
    %v89 = vld [vmem:[#allocation2 + $0x60] sm:$0xff]
    %v90 = vld [vmem:[#allocation2 + $0x68] sm:$0xff]
    %v91 = vld [vmem:[#allocation2 + $0x70] sm:$0xff]
    %v92 = vld [vmem:[#allocation2 + $0x78] sm:$0xff]
    %v93 = vld [vmem:[#allocation2 + $0x80] sm:$0xff]
    %v94 = vld [vmem:[#allocation2 + $0x88] sm:$0x1]
    %v95 = vlaneseq
    %v96 = vshrl.u32 %v95, 7
    %v97 = vsub.s32 0, %v96
    %v98 = vrot.slane %v94, %v97
    %99 = vmatprep.subr.mxu0 0.0
    %100 = vmatpush1.msra.mxu0 %v93
    %101 = vmatprep.subr.mxu0 0.0
    %102 = vmatpush1.msra.mxu0 %v92
    %103 = vmatprep.subr.mxu0 0.0
    %104 = vmatpush1.msra.mxu0 %v91
    %105 = vmatprep.subr.mxu0 0.0
    %106 = vmatpush1.msra.mxu0 %v90
    %107 = vmatprep.subr.mxu0 0.0
    %108 = vmatpush1.msra.mxu0 %v89
    %109 = vmatprep.subr.mxu0 0.0
    %110 = vmatpush1.msra.mxu0 %v88
    %111 = vmatprep.subr.mxu0 0.0
    %112 = vmatpush1.msra.mxu0 %v87
    %113 = vmatprep.subr.mxu0 0.0
    %114 = vmatpush1.msra.mxu0 %v86
    %115 = vmatprep.subr.mxu0 0.0
    %116 = vmatpush1.msra.mxu0 %v85
    %117 = vmatprep.subr.mxu0 0.0
    %118 = vmatpush1.msra.mxu0 %v84
    %119 = vmatprep.subr.mxu0 0.0
    %120 = vmatpush1.msra.mxu0 %v83
    %121 = vmatprep.subr.mxu0 0.0
    %122 = vmatpush1.msra.mxu0 %v82
    %123 = vmatprep.subr.mxu0 0.0
    %124 = vmatpush1.msra.mxu0 %v81
    %125 = vmatprep.subr.mxu0 0.0
    %126 = vmatpush1.msra.mxu0 %v80
    %127 = vmatprep.subr.mxu0 0.0
    %128 = vmatpush1.msra.mxu0 %v79
    %129 = vmatprep.subr.mxu0 0.0
    %130 = vmatpush1.msra.mxu0 %v78
    %131 = vmatprep.subr.mxu0 0.0
    %132 = vmatpush2.msra.mxu0 0.0
    %133 = vmatprep.subr.mxu0 0.0
    %134 = vmatpush2.msra.mxu0 0.0
    %135 = vmatprep.subr.mxu0 0.0
    %136 = vmatpush2.msra.mxu0 0.0
    %137 = vmatprep.subr.mxu0 0.0
    %138 = vmatpush2.msra.mxu0 0.0
    %139 = vmatprep.subr.mxu0 0.0
    %140 = vmatpush2.msra.mxu0 0.0
    %141 = vmatprep.subr.mxu0 0.0
    %142 = vmatpush2.msra.mxu0 0.0
    %143 = vmatprep.subr.mxu0 0.0
    %144 = vmatpush2.msra.mxu0 0.0
    %145 = vmatprep.subr.mxu0 0.0
    %146 = vmatpush2.msra.mxu0 0.0
    %147 = vmatprep.subr.mxu0 0.0
    %148 = vmatpush2.msra.mxu0 0.0
    %149 = vmatprep.subr.mxu0 0.0
    %150 = vmatpush2.msra.mxu0 0.0
    %151 = vmatprep.subr.mxu0 0.0
    %152 = vmatpush2.msra.mxu0 0.0
    %153 = vmatprep.subr.mxu0 0.0
    %154 = vmatpush2.msra.mxu0 0.0
    %155 = vmatprep.subr.mxu0 0.0
    %156 = vmatpush2.msra.mxu0 0.0
    %157 = vmatprep.subr.mxu0 0.0
    %158 = vmatpush2.msra.mxu0 0.0
    %159 = vmatprep.subr.mxu0 0.0
    %160 = vmatpush2.msra.mxu0 0.0
    %161 = vmatprep.subr.mxu0 0.0
    %162 = vmatpush2.msra.mxu0 0.0
    %163 = vmatprep.mubr.f32.mxu0 0.0
    %164 = vmatmul.mubr.f32.gmra.mxu0 %v77
    %v165 = vpop.f32.mrf.mxu0
    %v166 = vadd.f32 %v98, %v165
    %v167 = vpop.f32.mrf.mxu0
    %168 = vdwg.mxu0
    %vm169 = vcmask 64512
    %170 = vst.msk [vmem:[#allocation5] sm:$0xff] %vm169, %v166
    // Predicated region
    $region14: #{tpu_custom_call.1} parent=1 // pred_check
      _
    $region15: #{tpu_custom_call.1} parent=1 // pred_check_branch
      %172 = sbr.rel (0) target = $region17
    $region16: #{tpu_custom_call.1} parent=1 // pred_region
      %s174 = ssub.s32 128, 128
      %175 = vsyncadd [#allocation4], %s174
      %s177 = sshll.u32 [#allocation5], 4
      %s178 = int_to_ptr.vmem [resolvable:$true] %s177
      %180 = dma.vmem_to_hbm [thread:$0]  %s178, 128, %s2, [#allocation4]
    $region17: #{tpu_custom_call.1} parent=1 // pred_fallthru
      _
    // Predicated region
    $region18: #{tpu_custom_call.1} parent=1 // pred_check
      _
    $region19: #{tpu_custom_call.1} parent=1 // pred_check_branch
      %182 = sbr.rel (0) target = $region21
    $region20: #{tpu_custom_call.1} parent=1 // pred_region
      %183 = dma.done [#allocation4], 128
    $region21: #{tpu_custom_call.1} parent=1 // pred_fallthru
      _
    %184 = vsyncpa [#allocation3], 1
    %185 = vsyncpa [#allocation4], 1

</llo_original>
